<compile_context>
chip_gen: v7x
topology: tpu7x:2x2x1
jax: 0.10.0
libtpu: 0.0.40
codegen_flags: <defaults>
</compile_context>

<pallas_src>
import jax
import jax.numpy as jnp
from jax.experimental import pallas as pl
from jax.experimental.pallas import tpu as pltpu


def _round_up(x, m):
    return -(-x // m) * m


def _tpu_generation():
    """Best-effort TPU generation (5/6/7...); 0 if unknown."""
    try:
        kind = jax.devices()[0].device_kind.lower()
    except Exception:
        return 0
    for tok, gen in (("v7", 7), ("v6", 6), ("v5", 5), ("v4", 4)):
        if tok in kind:
            return gen
    return 0


def _make_kernel(use_bf16_tanh):
    def kernel(x_ref, w1_ref, b1_ref, w2_ref, b2_ref, o_ref):
        # x_ref : (TM, F)    incoming dtype, streamed batch tile
        # w1_ref: (F, Hp)    f32, resident
        # b1_ref: (1, Hp)    f32, resident
        # w2_ref: (1, Hp)    f32, resident (second-layer weight, transposed)
        # b2_ref: (1,)       f32, SMEM scalar
        # o_ref : (1, 1, TM) f32, lane-dense scores for this tile
        h = jnp.dot(x_ref[...], w1_ref[...], preferred_element_type=jnp.float32)
        h = h + b1_ref[...]
        if use_bf16_tanh:
            # v7x: bf16 EUP tanh (~2x throughput); upcast for the w2 reduce.
            h = jnp.tanh(h.astype(jnp.bfloat16)).astype(jnp.float32)
        else:
            h = jnp.tanh(h)
        # Second layer (N=1): VPU multiply + XLU cross-lane reduce instead of
        # an MXU matmul whose result would occupy a single lane.
        scores = jnp.sum(h * w2_ref[...], axis=-1) + b2_ref[0]
        o_ref[...] = jax.nn.sigmoid(scores).reshape(o_ref.shape).astype(o_ref.dtype)
    return kernel


def linear_classifier_forward(x, w1, b1, w2, b2):
    """Forward pass of LinearClassifier (eval mode; dropout == identity).

    x  : [B, 2*encoding_size]   (streamed in its incoming dtype)
    w1 : [2*encoding_size, hidden]   (transposed vs. PyTorch's [out, in])
    b1 : [hidden] or [1, hidden]
    w2 : [hidden, 1]
    b2 : scalar-like ([1] or [1, 1])
    returns [B, 1] in x.dtype
    """
    B, F = x.shape
    H = w1.shape[1]
    out_dtype = x.dtype
    x_itemsize = jnp.dtype(x.dtype).itemsize

    gen = _tpu_generation()
    try:
        vmem_cap = int(pltpu.get_tpu_info().vmem_capacity_bytes)
    except Exception:
        vmem_cap = 128 << 20
    vmem_cap = max(vmem_cap, 32 << 20)
    # ~48 MiB on 128 MiB parts (v5e/v6e), ~32 MiB on 64 MiB parts (v7x).
    vmem_ceiling = min(48 << 20, vmem_cap // 2)

    # ---- layout prep (once per call, outside the kernel) -------------------
    # Pad hidden dim to a lane-dense multiple of 128.  Padded columns give
    # tanh(0 + 0) = 0 and meet a zero W2 entry, so the math is unchanged.
    Hp = _round_up(H, 128)
    w1p = jnp.pad(jnp.asarray(w1, dtype=jnp.float32), ((0, 0), (0, Hp - H)))
    b1p = jnp.pad(jnp.asarray(b1, dtype=jnp.float32).reshape(1, H),
                  ((0, 0), (0, Hp - H)))
    w2p = jnp.pad(jnp.asarray(w2, dtype=jnp.float32).reshape(1, H),
                  ((0, 0), (0, Hp - H)))
    b2s = jnp.asarray(b2, dtype=jnp.float32).reshape(1)

    # ---- batch tiling -------------------------------------------------------
    # Stream ~2 MiB of x per grid step (>= 1024 rows), multiple of 128.
    tm = _round_up(max(1024, (2 << 20) // max(1, x_itemsize * F)), 128)
    # Keep the per-step working set inside the VMEM budget:
    #   x double-buffer + f32 hidden + output slab, leaving room for W1 + slack.
    per_row = 2 * F * x_itemsize + Hp * 4 + 16
    tm_budget = vmem_ceiling - 2 * F * Hp * 4 - (6 << 20)
    if tm_budget > per_row * 128:
        tm = min(tm, (tm_budget // per_row) // 128 * 128)
    B128 = _round_up(B, 128)
    tm = min(tm, B128)
    if gen >= 7 and B128 >= 256:
        # 2 TensorCores per chip: keep >= 2 grid steps so both get work.
        tm = min(tm, _round_up(B128 // 2, 128))
    tm = max(tm, 128)

    n_tiles = pl.cdiv(B, tm)
    if B < tm:
        # Batch smaller than one tile: cheap pad (a handful of rows) so the
        # block window never exceeds the array.  For B >= tm the ragged last
        # tile is handled by the cdiv grid: rows past B hold per-row garbage,
        # never feed a cross-row reduction, and are sliced off below.
        x_in = jnp.pad(x, ((0, tm - B), (0, 0)))
    else:
        x_in = x

    # ---- VMEM budget (honest: counts W1 double-buffer for the fallback) ----
    vmem_est = (2 * tm * F * x_itemsize      # double-buffered x tile
                + 2 * F * Hp * 4             # W1 (up to 2 buffers)
                + 4 * Hp * 4                 # b1 + w2
                + tm * Hp * 4                # f32 hidden activations
                + 4 * tm * 4                 # double-buffered (1,1,TM) output
                + (4 << 20))                 # Mosaic internal scratch slack
    vmem_bytes = int(min(max(vmem_est, 16 << 20), vmem_ceiling))

    kernel = _make_kernel(use_bf16_tanh=(gen >= 7))

    def _build(resident_mode):
        def resident_spec(shape):
            if resident_mode is None:
                return pl.BlockSpec(shape, lambda i: (0, 0))
            return pl.BlockSpec(shape, lambda i: (0, 0),
                                pipeline_mode=resident_mode)
        return pl.pallas_call(
            kernel,
            out_shape=jax.ShapeDtypeStruct((n_tiles, 1, tm), jnp.float32),
            grid=(n_tiles,),
            in_specs=[
                pl.BlockSpec((tm, F), lambda i: (i, 0)),           # x: streamed
                resident_spec((F, Hp)),                            # W1: resident
                resident_spec((1, Hp)),                            # b1: resident
                resident_spec((1, Hp)),                            # W2^T: resident
                pl.BlockSpec(memory_space=pltpu.MemorySpace.SMEM), # b2 scalar
            ],
            out_specs=pl.BlockSpec((1, 1, tm), lambda i: (i, 0, 0)),
            compiler_params=pltpu.CompilerParams(
                dimension_semantics=("parallel",),
                vmem_limit_bytes=vmem_bytes,
            ),
        )

    try:
        # Single-buffer the resident operands (constant index_map).
        out = _build(pl.Buffered(1))(x_in, w1p, b1p, w2p, b2s)
    except Exception:
        # This jax build rejects Buffered(1); default double-buffering only
        # costs an extra F*Hp*4 bytes of VMEM here.
        out = _build(None)(x_in, w1p, b1p, w2p, b2s)

    return out.reshape(n_tiles * tm)[:B].reshape(B, 1).astype(out_dtype)


def init_params(key, encoding_size, hidden_size, dtype=jnp.float32):
    """Deterministic PyTorch-style (uniform +-1/sqrt(fan_in)) initialization."""
    k1, k2, k3, k4 = jax.random.split(key, 4)
    in1 = 2 * encoding_size
    bound1 = 1.0 / (in1 ** 0.5)
    bound2 = 1.0 / (hidden_size ** 0.5)
    w1 = jax.random.uniform(k1, (in1, hidden_size), dtype, -bound1, bound1)
    b1 = jax.random.uniform(k2, (1, hidden_size), dtype, -bound1, bound1)
    w2 = jax.random.uniform(k3, (hidden_size, 1), dtype, -bound2, bound2)
    b2 = jax.random.uniform(k4, (1, 1), dtype, -bound2, bound2)
    return w1, b1, w2, b2


if __name__ == "__main__":
    key = jax.random.PRNGKey(0)
    kx, kp = jax.random.split(key)

    batch = 8
    encoding_size = 64      # input features = 2 * encoding_size = 128
    hidden_size = 32

    x = jax.random.normal(kx, (batch, 2 * encoding_size), jnp.float32)
    w1, b1, w2, b2 = init_params(kp, encoding_size, hidden_size)

    # TODO(synk): nn.Dropout is identity in eval mode; train-mode dropout not implemented.
    out = linear_classifier_forward(x, w1, b1, w2, b2)
    out = jax.block_until_ready(out)
    assert out.shape == (batch, 1)

    # Reference (full f32).  The kernel path is f32 end-to-end except on v7x,
    # where tanh runs in bf16 on the EUP (looser tolerance there).
    ref = jax.nn.sigmoid(jnp.tanh(x @ w1 + b1) @ w2 + b2)
    tol = 2e-2 if _tpu_generation() >= 7 else 1e-3
    max_err = float(jnp.max(jnp.abs(out - ref)))
    assert jnp.allclose(out, ref, atol=tol, rtol=tol), max_err

    print("KERNEL_OK")
</pallas_src>

<mosaic_0001>
module attributes {stable_mosaic.version = 11 : i64} {
  func.func @kernel(%arg0: i32, %arg1: memref<128x128xf32, #tpu.memory_space<vmem>>, %arg2: memref<128x128xf32, #tpu.memory_space<vmem>>, %arg3: memref<1x128xf32, #tpu.memory_space<vmem>>, %arg4: memref<1x128xf32, #tpu.memory_space<vmem>>, %arg5: memref<1xf32, #tpu.memory_space<smem>>, %arg6: memref<1x1x128xf32, #tpu.memory_space<vmem>>) attributes {dimension_semantics = [#tpu.dimension_semantics<parallel>], iteration_bounds = array<i64: 1>, scalar_prefetch = 0 : i64, scratch_operands = 0 : i64, tpu.core_type = #tpu.core_type<tc>, window_params = [{transform_indices = @transform_0, window_bounds = array<i64: 128, 128>}, {pipeline_mode = #tpu.pipeline_mode<synchronous>, transform_indices = @transform_1, window_bounds = array<i64: 128, 128>}, {pipeline_mode = #tpu.pipeline_mode<synchronous>, transform_indices = @transform_2, window_bounds = array<i64: 1, 128>}, {pipeline_mode = #tpu.pipeline_mode<synchronous>, transform_indices = @transform_3, window_bounds = array<i64: 1, 128>}, {transform_indices = @transform_4, window_bounds = array<i64: 1>}, {transform_indices = @transform_5, window_bounds = array<i64: 1, 1, 128>}]} {
    %c0 = arith.constant 0 : index
    %c0_0 = arith.constant 0 : index
    %0 = vector.load %arg1[%c0, %c0_0] : memref<128x128xf32, #tpu.memory_space<vmem>>, vector<128x128xf32>
    %c0_1 = arith.constant 0 : index
    %c0_2 = arith.constant 0 : index
    %1 = vector.load %arg2[%c0_1, %c0_2] : memref<128x128xf32, #tpu.memory_space<vmem>>, vector<128x128xf32>
    %cst = arith.constant dense<0.000000e+00> : vector<128x128xf32>
    %2 = tpu.matmul %0, %1, %cst {dimension_numbers = #tpu.dot_dimension_numbers<[1], [0], [0], [1], [0, 0, 1, 1], [], []>} : vector<128x128xf32>, vector<128x128xf32>, vector<128x128xf32> -> vector<128x128xf32>
    %c0_3 = arith.constant 0 : index
    %c0_4 = arith.constant 0 : index
    %3 = vector.load %arg3[%c0_3, %c0_4] : memref<1x128xf32, #tpu.memory_space<vmem>>, vector<1x128xf32>
    %4 = vector.broadcast %3 : vector<1x128xf32> to vector<128x128xf32>
    %5 = arith.addf %2, %4 : vector<128x128xf32>
    %6 = math.tanh %5 : vector<128x128xf32>
    %c0_5 = arith.constant 0 : index
    %c0_6 = arith.constant 0 : index
    %7 = vector.load %arg4[%c0_5, %c0_6] : memref<1x128xf32, #tpu.memory_space<vmem>>, vector<1x128xf32>
    %8 = vector.broadcast %7 : vector<1x128xf32> to vector<128x128xf32>
    %9 = arith.mulf %6, %8 : vector<128x128xf32>
    %cst_7 = arith.constant dense<0.000000e+00> : vector<128xf32>
    %10 = vector.multi_reduction <add>, %9, %cst_7 [1] : vector<128x128xf32> to vector<128xf32>
    %c0_8 = arith.constant 0 : index
    %11 = memref.load %arg5[%c0_8] : memref<1xf32, #tpu.memory_space<smem>>
    %12 = vector.broadcast %11 : f32 to vector<128xf32>
    %13 = arith.addf %10, %12 : vector<128xf32>
    %14 = arith.negf %13 : vector<128xf32>
    %15 = math.exp %14 : vector<128xf32>
    %cst_9 = arith.constant 1.000000e+00 : f32
    %16 = vector.broadcast %cst_9 : f32 to vector<128xf32>
    %17 = arith.addf %16, %15 : vector<128xf32>
    %18 = arith.divf %16, %17 : vector<128xf32>
    %19 = vector.shape_cast %18 : vector<128xf32> to vector<1x1x128xf32>
    %c0_10 = arith.constant 0 : index
    %c0_11 = arith.constant 0 : index
    %c0_12 = arith.constant 0 : index
    %20 = vector.load %arg6[%c0_10, %c0_11, %c0_12] : memref<1x1x128xf32, #tpu.memory_space<vmem>>, vector<1x1x128xf32>
    tpu.vector_store %arg6[%c0_10, %c0_11, %c0_12], %19 {strides = array<i32>} : memref<1x1x128xf32, #tpu.memory_space<vmem>>, vector<1x1x128xf32>,
    return
  }
  func.func @transform_0(%arg0: i32) -> (i32, i32) {
    %c0_i32 = arith.constant 0 : i32
    %c0_i32_0 = arith.constant 0 : i32
    return %arg0, %c0_i32 : i32, i32
  }
  func.func @transform_1(%arg0: i32) -> (i32, i32) {
    %c0_i32 = arith.constant 0 : i32
    %c0_i32_0 = arith.constant 0 : i32
    %c0_i32_1 = arith.constant 0 : i32
    return %c0_i32, %c0_i32_0 : i32, i32
  }
  func.func @transform_2(%arg0: i32) -> (i32, i32) {
    %c0_i32 = arith.constant 0 : i32
    %c0_i32_0 = arith.constant 0 : i32
    %c0_i32_1 = arith.constant 0 : i32
    return %c0_i32, %c0_i32_0 : i32, i32
  }
  func.func @transform_3(%arg0: i32) -> (i32, i32) {
    %c0_i32 = arith.constant 0 : i32
    %c0_i32_0 = arith.constant 0 : i32
    %c0_i32_1 = arith.constant 0 : i32
    return %c0_i32, %c0_i32_0 : i32, i32
  }
  func.func @transform_4(%arg0: i32) -> i32 {
    %c0_i32 = arith.constant 0 : i32
    %c0_i32_0 = arith.constant 0 : i32
    return %c0_i32 : i32
  }
  func.func @transform_5(%arg0: i32) -> (i32, i32, i32) {
    %c0_i32 = arith.constant 0 : i32
    %c0_i32_0 = arith.constant 0 : i32
    %c0_i32_1 = arith.constant 0 : i32
    return %arg0, %c0_i32, %c0_i32_0 : i32, i32, i32
  }
}

module attributes {stable_mosaic.version = 11 : i64} {
  func.func @kernel(%arg0: i32, %arg1: memref<128x128xf32, #tpu.memory_space<vmem>>, %arg2: memref<128x128xf32, #tpu.memory_space<vmem>>, %arg3: memref<1x128xf32, #tpu.memory_space<vmem>>, %arg4: memref<1x128xf32, #tpu.memory_space<vmem>>, %arg5: memref<1xf32, #tpu.memory_space<smem>>, %arg6: memref<1x1x128xf32, #tpu.memory_space<vmem>>) attributes {dimension_semantics = [#tpu.dimension_semantics<parallel>], iteration_bounds = array<i64: 1>, scalar_prefetch = 0 : i64, scratch_operands = 0 : i64, tpu.core_type = #tpu.core_type<tc>, window_params = [{transform_indices = @transform_0, window_bounds = array<i64: 128, 128>}, {pipeline_mode = #tpu.pipeline_mode<synchronous>, transform_indices = @transform_1, window_bounds = array<i64: 128, 128>}, {pipeline_mode = #tpu.pipeline_mode<synchronous>, transform_indices = @transform_2, window_bounds = array<i64: 1, 128>}, {pipeline_mode = #tpu.pipeline_mode<synchronous>, transform_indices = @transform_3, window_bounds = array<i64: 1, 128>}, {transform_indices = @transform_4, window_bounds = array<i64: 1>}, {transform_indices = @transform_5, window_bounds = array<i64: 1, 1, 128>}]} {
    %c0 = arith.constant 0 : index
    %c0_0 = arith.constant 0 : index
    %0 = vector.load %arg1[%c0, %c0_0] : memref<128x128xf32, #tpu.memory_space<vmem>>, vector<128x128xf32>
    %c0_1 = arith.constant 0 : index
    %c0_2 = arith.constant 0 : index
    %1 = vector.load %arg2[%c0_1, %c0_2] : memref<128x128xf32, #tpu.memory_space<vmem>>, vector<128x128xf32>
    %cst = arith.constant dense<0.000000e+00> : vector<128x128xf32>
    %2 = tpu.matmul %0, %1, %cst {dimension_numbers = #tpu.dot_dimension_numbers<[1], [0], [0], [1], [0, 0, 1, 1], [], []>} : vector<128x128xf32>, vector<128x128xf32>, vector<128x128xf32> -> vector<128x128xf32>
    %c0_3 = arith.constant 0 : index
    %c0_4 = arith.constant 0 : index
    %3 = vector.load %arg3[%c0_3, %c0_4] : memref<1x128xf32, #tpu.memory_space<vmem>>, vector<1x128xf32>
    %4 = vector.broadcast %3 : vector<1x128xf32> to vector<128x128xf32>
    %5 = arith.addf %2, %4 : vector<128x128xf32>
    %6 = math.tanh %5 : vector<128x128xf32>
    %c0_5 = arith.constant 0 : index
    %c0_6 = arith.constant 0 : index
    %7 = vector.load %arg4[%c0_5, %c0_6] : memref<1x128xf32, #tpu.memory_space<vmem>>, vector<1x128xf32>
    %8 = vector.broadcast %7 : vector<1x128xf32> to vector<128x128xf32>
    %9 = arith.mulf %6, %8 : vector<128x128xf32>
    %cst_7 = arith.constant dense<0.000000e+00> : vector<128xf32>
    %10 = vector.multi_reduction <add>, %9, %cst_7 [1] : vector<128x128xf32> to vector<128xf32>
    %c0_8 = arith.constant 0 : index
    %11 = memref.load %arg5[%c0_8] : memref<1xf32, #tpu.memory_space<smem>>
    %12 = vector.broadcast %11 : f32 to vector<128xf32>
    %13 = arith.addf %10, %12 : vector<128xf32>
    %14 = arith.negf %13 : vector<128xf32>
    %15 = math.exp %14 : vector<128xf32>
    %cst_9 = arith.constant 1.000000e+00 : f32
    %16 = vector.broadcast %cst_9 : f32 to vector<128xf32>
    %17 = arith.addf %16, %15 : vector<128xf32>
    %18 = arith.divf %16, %17 : vector<128xf32>
    %19 = vector.shape_cast %18 : vector<128xf32> to vector<1x1x128xf32>
    %c0_10 = arith.constant 0 : index
    %c0_11 = arith.constant 0 : index
    %c0_12 = arith.constant 0 : index
    %20 = vector.load %arg6[%c0_10, %c0_11, %c0_12] : memref<1x1x128xf32, #tpu.memory_space<vmem>>, vector<1x1x128xf32>
    tpu.vector_store %arg6[%c0_10, %c0_11, %c0_12], %19 {strides = array<i32>} : memref<1x1x128xf32, #tpu.memory_space<vmem>>, vector<1x1x128xf32>,
    return
  }
  func.func @transform_0(%arg0: i32) -> (i32, i32) {
    %c0_i32 = arith.constant 0 : i32
    %c0_i32_0 = arith.constant 0 : i32
    return %arg0, %c0_i32 : i32, i32
  }
  func.func @transform_1(%arg0: i32) -> (i32, i32) {
    %c0_i32 = arith.constant 0 : i32
    %c0_i32_0 = arith.constant 0 : i32
    %c0_i32_1 = arith.constant 0 : i32
    return %c0_i32, %c0_i32_0 : i32, i32
  }
  func.func @transform_2(%arg0: i32) -> (i32, i32) {
    %c0_i32 = arith.constant 0 : i32
    %c0_i32_0 = arith.constant 0 : i32
    %c0_i32_1 = arith.constant 0 : i32
    return %c0_i32, %c0_i32_0 : i32, i32
  }
  func.func @transform_3(%arg0: i32) -> (i32, i32) {
    %c0_i32 = arith.constant 0 : i32
    %c0_i32_0 = arith.constant 0 : i32
    %c0_i32_1 = arith.constant 0 : i32
    return %c0_i32, %c0_i32_0 : i32, i32
  }
  func.func @transform_4(%arg0: i32) -> i32 {
    %c0_i32 = arith.constant 0 : i32
    %c0_i32_0 = arith.constant 0 : i32
    return %c0_i32 : i32
  }
  func.func @transform_5(%arg0: i32) -> (i32, i32, i32) {
    %c0_i32 = arith.constant 0 : i32
    %c0_i32_0 = arith.constant 0 : i32
    %c0_i32_1 = arith.constant 0 : i32
    return %arg0, %c0_i32, %c0_i32_0 : i32, i32, i32
  }
}

</mosaic_0001>

<llo_original>
// kernel: tpu_custom_call.1
$region0: #{tpu_custom_call.1}
  #allocation0 [shape = 'u32[]', space=smem, size = 0x4, offset = 0x4, fixed_abs, tag = 'smem constant byte address 0x4 - core index']
  #allocation1 [shape = 'u32[144,128]{1,0:T(1,128)}', space=vmem, size = 0x12000, scoped, tag = 'internal scratch']
  #allocation2 [shape = 'f32[1]{0:T(128)S(6)}', space=smem, size = 0x200, scoped, tag = 'scoped memory for tpu_custom_call.1']
  %s0 = inlined_call_operand.hbm [shape: f32[128,128], index: 0, kind: input, shape index: {}]
  %s1 = inlined_call_operand.hbm [shape: f32[128,128], index: 1, kind: input, shape index: {}]
  %s2 = inlined_call_operand.vmem [shape: f32[1,128], index: 2, kind: input, shape index: {}]
  %s3 = inlined_call_operand.vmem [shape: f32[1,128], index: 3, kind: input, shape index: {}]
  %s4 = inlined_call_operand.<no memory space> [shape: f32[1], index: 4, kind: input, shape index: {}]
  %s5 = inlined_call_operand.hbm [shape: f32[1,1,128], index: 5, kind: output, shape index: {}]
  %s6 = sld [smem:[#allocation0]]
  $region38: #{tpu_custom_call.1} parent=0
    _
  %s8 = ssub.s32 1, %s6
  %s9 = scalar_select 0, %s8, %s6
  %10 = sst [smem:[#allocation2]] %s4
  $region1: #{tpu_custom_call.1} parent=0
    #allocation3 [shape = 'u8[65536]{0}', space=vmem, size = 0x10000, scoped, tag = 'input window, operand 0, single buffered']
    #allocation4 [shape = 's32[1]{0}', space=sflag, size = 0x4, scoped, tag = 'scoped memory for tpu_custom_call.1']
    #allocation5 [shape = 's32[1]{0}', space=sflag, size = 0x4, scoped, tag = 'scoped memory for tpu_custom_call.1']
    #allocation6 [shape = 'u8[65536]{0}', space=vmem, size = 0x10000, scoped, tag = 'input window, operand 1, single buffered']
    #allocation7 [shape = 's32[1]{0}', space=sflag, size = 0x4, scoped, tag = 'scoped memory for tpu_custom_call.1']
    #allocation8 [shape = 'u8[512]{0}', space=vmem, size = 0x400, scoped, tag = 'output window, operand 0, single buffered']
    %11 = vsyncpa [#allocation4], 0
    %12 = vsyncpa [#allocation7], 0
    %13 = vsyncpa [#allocation5], 0
    // Predicated region
    $region2: #{tpu_custom_call.1} parent=1 // pred_check
      _
    $region3: #{tpu_custom_call.1} parent=1 // pred_check_branch
      %15 = sbr.rel (0) target = $region5
    $region4: #{tpu_custom_call.1} parent=1 // pred_region
      %s17 = ssub.s32 2048, 2048
      %18 = vsyncadd [#allocation4], %s17
      %s19 = sshll.u32 [#allocation3], 4
      %s20 = int_to_ptr.vmem [resolvable:$true] %s19
      %25 = dma.hbm_to_vmem [thread:$0]  %s0, 2048, %s20, [#allocation4], 128, 128, 8
    $region5: #{tpu_custom_call.1} parent=1 // pred_fallthru
      _
    // Predicated region
    $region6: #{tpu_custom_call.1} parent=1 // pred_check
      _
    $region7: #{tpu_custom_call.1} parent=1 // pred_check_branch
      %27 = sbr.rel (0) target = $region9
    $region8: #{tpu_custom_call.1} parent=1 // pred_region
      %s29 = ssub.s32 2048, 2048
      %30 = vsyncadd [#allocation7], %s29
      %s31 = sshll.u32 [#allocation6], 4
      %s32 = int_to_ptr.vmem [resolvable:$true] %s31
      %37 = dma.hbm_to_vmem [thread:$0]  %s1, 2048, %s32, [#allocation7], 128, 128, 8
    $region9: #{tpu_custom_call.1} parent=1 // pred_fallthru
      _
    // Predicated region
    $region10: #{tpu_custom_call.1} parent=1 // pred_check
      _
    $region11: #{tpu_custom_call.1} parent=1 // pred_check_branch
      %39 = sbr.rel (0) target = $region13
    $region12: #{tpu_custom_call.1} parent=1 // pred_region
      _
    $region13: #{tpu_custom_call.1} parent=1 // pred_fallthru
      _
    // Predicated region
    $region14: #{tpu_custom_call.1} parent=1 // pred_check
      _
    $region15: #{tpu_custom_call.1} parent=1 // pred_check_branch
      %41 = sbr.rel (0) target = $region17
    $region16: #{tpu_custom_call.1} parent=1 // pred_region
      _
    $region17: #{tpu_custom_call.1} parent=1 // pred_fallthru
      _
    // Predicated region
    $region18: #{tpu_custom_call.1} parent=1 // pred_check
      _
    $region19: #{tpu_custom_call.1} parent=1 // pred_check_branch
      %43 = sbr.rel (0) target = $region21
    $region20: #{tpu_custom_call.1} parent=1 // pred_region
      _
    $region21: #{tpu_custom_call.1} parent=1 // pred_fallthru
      _
    // Predicated region
    $region22: #{tpu_custom_call.1} parent=1 // pred_check
      _
    $region23: #{tpu_custom_call.1} parent=1 // pred_check_branch
      %45 = sbr.rel (0) target = $region25
    $region24: #{tpu_custom_call.1} parent=1 // pred_region
      %46 = dma.done [#allocation4], 2048
    $region25: #{tpu_custom_call.1} parent=1 // pred_fallthru
      _
    // Predicated region
    $region26: #{tpu_custom_call.1} parent=1 // pred_check
      _
    $region27: #{tpu_custom_call.1} parent=1 // pred_check_branch
      %48 = sbr.rel (0) target = $region29
    $region28: #{tpu_custom_call.1} parent=1 // pred_region
      %49 = dma.done [#allocation7], 2048
    $region29: #{tpu_custom_call.1} parent=1 // pred_fallthru
      _
    %v50 = vld [vmem:[#allocation3] sm:$0xff]
    %v51 = vld [vmem:[#allocation3 + $0x8] sm:$0xff]
    %v52 = vld [vmem:[#allocation3 + $0x10] sm:$0xff]
    %v53 = vld [vmem:[#allocation3 + $0x18] sm:$0xff]
    %v54 = vld [vmem:[#allocation3 + $0x20] sm:$0xff]
    %v55 = vld [vmem:[#allocation3 + $0x28] sm:$0xff]
    %v56 = vld [vmem:[#allocation3 + $0x30] sm:$0xff]
    %v57 = vld [vmem:[#allocation3 + $0x38] sm:$0xff]
    %v58 = vld [vmem:[#allocation3 + $0x40] sm:$0xff]
    %v59 = vld [vmem:[#allocation3 + $0x48] sm:$0xff]
    %v60 = vld [vmem:[#allocation3 + $0x50] sm:$0xff]
    %v61 = vld [vmem:[#allocation3 + $0x58] sm:$0xff]
    %v62 = vld [vmem:[#allocation3 + $0x60] sm:$0xff]
    %v63 = vld [vmem:[#allocation3 + $0x68] sm:$0xff]
    %v64 = vld [vmem:[#allocation3 + $0x70] sm:$0xff]
    %v65 = vld [vmem:[#allocation3 + $0x78] sm:$0xff]
    %v66 = vld [vmem:[#allocation6] sm:$0xff]
    %v67 = vld [vmem:[#allocation6 + $0x8] sm:$0xff]
    %v68 = vld [vmem:[#allocation6 + $0x10] sm:$0xff]
    %v69 = vld [vmem:[#allocation6 + $0x18] sm:$0xff]
    %v70 = vld [vmem:[#allocation6 + $0x20] sm:$0xff]
    %v71 = vld [vmem:[#allocation6 + $0x28] sm:$0xff]
    %v72 = vld [vmem:[#allocation6 + $0x30] sm:$0xff]
    %v73 = vld [vmem:[#allocation6 + $0x38] sm:$0xff]
    %v74 = vld [vmem:[#allocation6 + $0x40] sm:$0xff]
    %v75 = vld [vmem:[#allocation6 + $0x48] sm:$0xff]
    %v76 = vld [vmem:[#allocation6 + $0x50] sm:$0xff]
    %v77 = vld [vmem:[#allocation6 + $0x58] sm:$0xff]
    %v78 = vld [vmem:[#allocation6 + $0x60] sm:$0xff]
    %v79 = vld [vmem:[#allocation6 + $0x68] sm:$0xff]
    %v80 = vld [vmem:[#allocation6 + $0x70] sm:$0xff]
    %v81 = vld [vmem:[#allocation6 + $0x78] sm:$0xff]
    %v82 = vld [vmem:[%s2] sm:$0x1]
    %v84 = vlaneseq
    %v85 = vshrl.u32 %v84, 7
    %v86 = vsub.s32 0, %v85
    %v87 = vrot.slane %v82, %v86
    %89 = vmatprep.subr.mxu0 0.0
    %90 = vmatpush1.msra.mxu0 %v66
    %91 = vmatprep.subr.mxu0 0.0
    %92 = vmatpush1.msra.mxu0 %v67
    %93 = vmatprep.subr.mxu0 0.0
    %94 = vmatpush1.msra.mxu0 %v68
    %95 = vmatprep.subr.mxu0 0.0
    %96 = vmatpush1.msra.mxu0 %v69
    %97 = vmatprep.subr.mxu0 0.0
    %98 = vmatpush1.msra.mxu0 %v70
    %99 = vmatprep.subr.mxu0 0.0
    %100 = vmatpush1.msra.mxu0 %v71
    %101 = vmatprep.subr.mxu0 0.0
    %102 = vmatpush1.msra.mxu0 %v72
    %103 = vmatprep.subr.mxu0 0.0
    %104 = vmatpush1.msra.mxu0 %v73
    %105 = vmatprep.subr.mxu0 0.0
    %106 = vmatpush1.msra.mxu0 %v74
    %107 = vmatprep.subr.mxu0 0.0
    %108 = vmatpush1.msra.mxu0 %v75
    %109 = vmatprep.subr.mxu0 0.0
    %110 = vmatpush1.msra.mxu0 %v76
    %111 = vmatprep.subr.mxu0 0.0
    %112 = vmatpush1.msra.mxu0 %v77
    %113 = vmatprep.subr.mxu0 0.0
    %114 = vmatpush1.msra.mxu0 %v78
    %115 = vmatprep.subr.mxu0 0.0
    %116 = vmatpush1.msra.mxu0 %v79
    %117 = vmatprep.subr.mxu0 0.0
    %118 = vmatpush1.msra.mxu0 %v80
    %119 = vmatprep.subr.mxu0 0.0
    %120 = vmatpush1.msra.mxu0 %v81
    %121 = vmatprep.subr.mxu0 0.0
    %122 = vmatpush1.msra.mxu0 0.0
    %123 = vmatprep.subr.mxu0 0.0
    %124 = vmatpush1.msra.mxu0 0.0
    %125 = vmatprep.subr.mxu0 0.0
    %126 = vmatpush1.msra.mxu0 0.0
    %127 = vmatprep.subr.mxu0 0.0
    %128 = vmatpush1.msra.mxu0 0.0
    %129 = vmatprep.subr.mxu0 0.0
    %130 = vmatpush1.msra.mxu0 0.0
    %131 = vmatprep.subr.mxu0 0.0
    %132 = vmatpush1.msra.mxu0 0.0
    %133 = vmatprep.subr.mxu0 0.0
    %134 = vmatpush1.msra.mxu0 0.0
    %135 = vmatprep.subr.mxu0 0.0
    %136 = vmatpush1.msra.mxu0 0.0
    %137 = vmatprep.subr.mxu0 0.0
    %138 = vmatpush1.msra.mxu0 0.0
    %139 = vmatprep.subr.mxu0 0.0
    %140 = vmatpush1.msra.mxu0 0.0
    %141 = vmatprep.subr.mxu0 0.0
    %142 = vmatpush1.msra.mxu0 0.0
    %143 = vmatprep.subr.mxu0 0.0
    %144 = vmatpush1.msra.mxu0 0.0
    %145 = vmatprep.subr.mxu0 0.0
    %146 = vmatpush1.msra.mxu0 0.0
    %147 = vmatprep.subr.mxu0 0.0
    %148 = vmatpush1.msra.mxu0 0.0
    %149 = vmatprep.subr.mxu0 0.0
    %150 = vmatpush1.msra.mxu0 0.0
    %151 = vmatprep.subr.mxu0 0.0
    %152 = vmatpush1.msra.mxu0 0.0
    %153 = vmatprep.mubr.f32.mxu0 0.0
    %154 = vmatmul.mubr.f32.gmra.mrb[0].mxu0 %v50
    %v155 = vpop.f32.mrb[0].mxu0
    %v156 = vadd.f32 %v87, %v155
    %v157 = vpop.f32.mrb[0].mxu0
    %158 = vmatprep.mubr.f32.mxu0 0.0
    %159 = vmatmul.mubr.f32.gmra.mrb[0].mxu0 %v51
    %v160 = vpop.f32.mrb[0].mxu0
    %v161 = vadd.f32 %v87, %v160
    %v162 = vpop.f32.mrb[0].mxu0
    %163 = vmatprep.mubr.f32.mxu0 0.0
    %164 = vmatmul.mubr.f32.gmra.mrb[0].mxu0 %v52
    %v165 = vpop.f32.mrb[0].mxu0
    %v166 = vadd.f32 %v87, %v165
    %v167 = vpop.f32.mrb[0].mxu0
    %168 = vmatprep.mubr.f32.mxu0 0.0
    %169 = vmatmul.mubr.f32.gmra.mrb[0].mxu0 %v53
    %v170 = vpop.f32.mrb[0].mxu0
    %v171 = vadd.f32 %v87, %v170
    %v172 = vpop.f32.mrb[0].mxu0
    %173 = vmatprep.mubr.f32.mxu0 0.0
    %174 = vmatmul.mubr.f32.gmra.mrb[0].mxu0 %v54
    %v175 = vpop.f32.mrb[0].mxu0
    %v176 = vadd.f32 %v87, %v175
    %v177 = vpop.f32.mrb[0].mxu0
    %178 = vmatprep.mubr.f32.mxu0 0.0
    %179 = vmatmul.mubr.f32.gmra.mrb[0].mxu0 %v55
    %v180 = vpop.f32.mrb[0].mxu0
    %v181 = vadd.f32 %v87, %v180
    %v182 = vpop.f32.mrb[0].mxu0
    %183 = vmatprep.mubr.f32.mxu0 0.0
    %184 = vmatmul.mubr.f32.gmra.mrb[0].mxu0 %v56
    %v185 = vpop.f32.mrb[0].mxu0
    %v186 = vadd.f32 %v87, %v185
    %v187 = vpop.f32.mrb[0].mxu0
    %188 = vmatprep.mubr.f32.mxu0 0.0
    %189 = vmatmul.mubr.f32.gmra.mrb[0].mxu0 %v57
    %v190 = vpop.f32.mrb[0].mxu0
    %v191 = vadd.f32 %v87, %v190
    %v192 = vpop.f32.mrb[0].mxu0
    %193 = vmatprep.mubr.f32.mxu0 0.0
    %194 = vmatmul.mubr.f32.gmra.mrb[0].mxu0 %v58
    %v195 = vpop.f32.mrb[0].mxu0
    %v196 = vadd.f32 %v87, %v195
    %v197 = vpop.f32.mrb[0].mxu0
    %198 = vmatprep.mubr.f32.mxu0 0.0
    %199 = vmatmul.mubr.f32.gmra.mrb[0].mxu0 %v59
    %v200 = vpop.f32.mrb[0].mxu0
    %v201 = vadd.f32 %v87, %v200
    %v202 = vpop.f32.mrb[0].mxu0
    %203 = vmatprep.mubr.f32.mxu0 0.0
    %204 = vmatmul.mubr.f32.gmra.mrb[0].mxu0 %v60
    %v205 = vpop.f32.mrb[0].mxu0
    %v206 = vadd.f32 %v87, %v205
    %v207 = vpop.f32.mrb[0].mxu0
    %208 = vmatprep.mubr.f32.mxu0 0.0
    %209 = vmatmul.mubr.f32.gmra.mrb[0].mxu0 %v61
    %v210 = vpop.f32.mrb[0].mxu0
    %v211 = vadd.f32 %v87, %v210
    %v212 = vpop.f32.mrb[0].mxu0
    %213 = vmatprep.mubr.f32.mxu0 0.0
    %214 = vmatmul.mubr.f32.gmra.mrb[0].mxu0 %v62
    %v215 = vpop.f32.mrb[0].mxu0
    %v216 = vadd.f32 %v87, %v215
    %v217 = vpop.f32.mrb[0].mxu0
    %218 = vmatprep.mubr.f32.mxu0 0.0
    %219 = vmatmul.mubr.f32.gmra.mrb[0].mxu0 %v63
    %v220 = vpop.f32.mrb[0].mxu0
    %v221 = vadd.f32 %v87, %v220
    %v222 = vpop.f32.mrb[0].mxu0
    %223 = vmatprep.mubr.f32.mxu0 0.0
    %224 = vmatmul.mubr.f32.gmra.mrb[0].mxu0 %v64
    %v225 = vpop.f32.mrb[0].mxu0
    %v226 = vadd.f32 %v87, %v225
    %v227 = vpop.f32.mrb[0].mxu0
    %228 = vmatprep.mubr.f32.mxu0 0.0
    %229 = vmatmul.mubr.f32.gmra.mrb[0].mxu0 %v65
    %v230 = vpop.f32.mrb[0].mxu0
    %v231 = vadd.f32 %v87, %v230
    %v232 = vpop.f32.mrb[0].mxu0
    %233 = vdwg.mxu0
    %v234 = vtanh.pop %v156
    %v235 = vtanh.pop %v161
    %v236 = vtanh.pop %v166
    %v237 = vtanh.pop %v171
    %v238 = vtanh.pop %v176
    %v239 = vtanh.pop %v181
    %v240 = vtanh.pop %v186
    %v241 = vtanh.pop %v191
    %v242 = vtanh.pop %v196
    %v243 = vtanh.pop %v201
    %v244 = vtanh.pop %v206
    %v245 = vtanh.pop %v211
    %v246 = vtanh.pop %v216
    %v247 = vtanh.pop %v221
    %v248 = vtanh.pop %v226
    %v249 = vtanh.pop %v231
    %v250 = vld [vmem:[%s3] sm:$0x1]
    %v252 = vlaneseq
    %v253 = vshrl.u32 %v252, 7
    %v254 = vsub.s32 0, %v253
    %v255 = vrot.slane %v250, %v254
    %v257 = vmul.f32 %v234, %v255
    %v258 = vmul.f32 %v235, %v255
    %v259 = vmul.f32 %v236, %v255
    %v260 = vmul.f32 %v237, %v255
    %v261 = vmul.f32 %v238, %v255
    %v262 = vmul.f32 %v239, %v255
    %v263 = vmul.f32 %v240, %v255
    %v264 = vmul.f32 %v241, %v255
    %v265 = vmul.f32 %v242, %v255
    %v266 = vmul.f32 %v243, %v255
    %v267 = vmul.f32 %v244, %v255
    %v268 = vmul.f32 %v245, %v255
    %v269 = vmul.f32 %v246, %v255
    %v270 = vmul.f32 %v247, %v255
    %v271 = vmul.f32 %v248, %v255
    %v272 = vmul.f32 %v249, %v255
    %273 = vadd.xlane.f32.xlu0 %v257
    %v274 = vpop.xlane.xlu0 %273
    %275 = vadd.xlane.f32.xlu0 %v258
    %v276 = vpop.xlane.xlu0 %275
    %277 = vadd.xlane.f32.xlu0 %v259
    %v278 = vpop.xlane.xlu0 %277
    %279 = vadd.xlane.f32.xlu0 %v260
    %v280 = vpop.xlane.xlu0 %279
    %281 = vadd.xlane.f32.xlu0 %v261
    %v282 = vpop.xlane.xlu0 %281
    %283 = vadd.xlane.f32.xlu0 %v262
    %v284 = vpop.xlane.xlu0 %283
    %285 = vadd.xlane.f32.xlu0 %v263
    %v286 = vpop.xlane.xlu0 %285
    %287 = vadd.xlane.f32.xlu0 %v264
    %v288 = vpop.xlane.xlu0 %287
    %289 = vadd.xlane.f32.xlu0 %v265
    %v290 = vpop.xlane.xlu0 %289
    %291 = vadd.xlane.f32.xlu0 %v266
    %v292 = vpop.xlane.xlu0 %291
    %293 = vadd.xlane.f32.xlu0 %v267
    %v294 = vpop.xlane.xlu0 %293
    %295 = vadd.xlane.f32.xlu0 %v268
    %v296 = vpop.xlane.xlu0 %295
    %297 = vadd.xlane.f32.xlu0 %v269
    %v298 = vpop.xlane.xlu0 %297
    %299 = vadd.xlane.f32.xlu0 %v270
    %v300 = vpop.xlane.xlu0 %299
    %301 = vadd.xlane.f32.xlu0 %v271
    %v302 = vpop.xlane.xlu0 %301
    %303 = vadd.xlane.f32.xlu0 %v272
    %v304 = vpop.xlane.xlu0 %303
    %s305 = sld [smem:[#allocation2]]
    %v306 = vstv %s305
    %v307 = vadd.f32 %v274, %v306
    %v308 = vadd.f32 %v276, %v306
    %v309 = vadd.f32 %v278, %v306
    %v310 = vadd.f32 %v280, %v306
    %v311 = vadd.f32 %v282, %v306
    %v312 = vadd.f32 %v284, %v306
    %v313 = vadd.f32 %v286, %v306
    %v314 = vadd.f32 %v288, %v306
    %v315 = vadd.f32 %v290, %v306
    %v316 = vadd.f32 %v292, %v306
    %v317 = vadd.f32 %v294, %v306
    %v318 = vadd.f32 %v296, %v306
    %v319 = vadd.f32 %v298, %v306
    %v320 = vadd.f32 %v300, %v306
    %v321 = vadd.f32 %v302, %v306
    %v322 = vadd.f32 %v304, %v306
    %v323 = vxor.u32 %v307, 2147483648
    %v324 = vxor.u32 %v308, 2147483648
    %v325 = vxor.u32 %v309, 2147483648
    %v326 = vxor.u32 %v310, 2147483648
    %v327 = vxor.u32 %v311, 2147483648
    %v328 = vxor.u32 %v312, 2147483648
    %v329 = vxor.u32 %v313, 2147483648
    %v330 = vxor.u32 %v314, 2147483648
    %v331 = vxor.u32 %v315, 2147483648
    %v332 = vxor.u32 %v316, 2147483648
    %v333 = vxor.u32 %v317, 2147483648
    %v334 = vxor.u32 %v318, 2147483648
    %v335 = vxor.u32 %v319, 2147483648
    %v336 = vxor.u32 %v320, 2147483648
    %v337 = vxor.u32 %v321, 2147483648
    %v338 = vxor.u32 %v322, 2147483648
    %v339 = vmul.f32 %v323, 1.442695
    %v340 = vpow.pop %v339
    %v341 = vmul.f32 %v324, 1.442695
    %v342 = vpow.pop %v341
    %v343 = vmul.f32 %v325, 1.442695
    %v344 = vpow.pop %v343
    %v345 = vmul.f32 %v326, 1.442695
    %v346 = vpow.pop %v345
    %v347 = vmul.f32 %v327, 1.442695
    %v348 = vpow.pop %v347
    %v349 = vmul.f32 %v328, 1.442695
    %v350 = vpow.pop %v349
    %v351 = vmul.f32 %v329, 1.442695
    %v352 = vpow.pop %v351
    %v353 = vmul.f32 %v330, 1.442695
    %v354 = vpow.pop %v353
    %v355 = vmul.f32 %v331, 1.442695
    %v356 = vpow.pop %v355
    %v357 = vmul.f32 %v332, 1.442695
    %v358 = vpow.pop %v357
    %v359 = vmul.f32 %v333, 1.442695
    %v360 = vpow.pop %v359
    %v361 = vmul.f32 %v334, 1.442695
    %v362 = vpow.pop %v361
    %v363 = vmul.f32 %v335, 1.442695
    %v364 = vpow.pop %v363
    %v365 = vmul.f32 %v336, 1.442695
    %v366 = vpow.pop %v365
    %v367 = vmul.f32 %v337, 1.442695
    %v368 = vpow.pop %v367
    %v369 = vmul.f32 %v338, 1.442695
    %v370 = vpow.pop %v369
    %v371 = vadd.f32 %v340, 1.0
    %v372 = vadd.f32 %v342, 1.0
    %v373 = vadd.f32 %v344, 1.0
    %v374 = vadd.f32 %v346, 1.0
    %v375 = vadd.f32 %v348, 1.0
    %v376 = vadd.f32 %v350, 1.0
    %v377 = vadd.f32 %v352, 1.0
    %v378 = vadd.f32 %v354, 1.0
    %v379 = vadd.f32 %v356, 1.0
    %v380 = vadd.f32 %v358, 1.0
    %v381 = vadd.f32 %v360, 1.0
    %v382 = vadd.f32 %v362, 1.0
    %v383 = vadd.f32 %v364, 1.0
    %v384 = vadd.f32 %v366, 1.0
    %v385 = vadd.f32 %v368, 1.0
    %v386 = vadd.f32 %v370, 1.0
    %v387 = vrcp.pop %v371
    %v388 = vmul.f32 1.0, %v387
    %v389 = vrcp.pop %v372
    %v390 = vmul.f32 1.0, %v389
    %v391 = vrcp.pop %v373
    %v392 = vmul.f32 1.0, %v391
    %v393 = vrcp.pop %v374
    %v394 = vmul.f32 1.0, %v393
    %v395 = vrcp.pop %v375
    %v396 = vmul.f32 1.0, %v395
    %v397 = vrcp.pop %v376
    %v398 = vmul.f32 1.0, %v397
    %v399 = vrcp.pop %v377
    %v400 = vmul.f32 1.0, %v399
    %v401 = vrcp.pop %v378
    %v402 = vmul.f32 1.0, %v401
    %v403 = vrcp.pop %v379
    %v404 = vmul.f32 1.0, %v403
    %v405 = vrcp.pop %v380
    %v406 = vmul.f32 1.0, %v405
    %v407 = vrcp.pop %v381
    %v408 = vmul.f32 1.0, %v407
    %v409 = vrcp.pop %v382
    %v410 = vmul.f32 1.0, %v409
    %v411 = vrcp.pop %v383
    %v412 = vmul.f32 1.0, %v411
    %v413 = vrcp.pop %v384
    %v414 = vmul.f32 1.0, %v413
    %v415 = vrcp.pop %v385
    %v416 = vmul.f32 1.0, %v415
    %v417 = vrcp.pop %v386
    %v418 = vmul.f32 1.0, %v417
    %v435 = vlaneseq
    %v436 = vand.u32 %v435, 127
    %v437 = vlaneseq
    %v438 = vshrl.u32 %v437, 7
    %v439 = vsub.s32 %v436, %v438
    %v440 = vrot.slane %v388, %v439
    %v441 = vadd.s32 %v436, 4294967288
    %v442 = vlaneseq
    %v443 = vshrl.u32 %v442, 7
    %v444 = vsub.s32 %v441, %v443
    %v445 = vrot.slane %v390, %v444
    %vm446 = vcmask 130112
    %v447 = vsel %vm446, %v445, %v440
    %v448 = vadd.s32 %v436, 4294967280
    %v449 = vlaneseq
    %v450 = vshrl.u32 %v449, 7
    %v451 = vsub.s32 %v448, %v450
    %v452 = vrot.slane %v392, %v451
    %vm453 = vcmask 195712
    %v454 = vsel %vm453, %v452, %v447
    %v455 = vadd.s32 %v436, 4294967272
    %v456 = vlaneseq
    %v457 = vshrl.u32 %v456, 7
    %v458 = vsub.s32 %v455, %v457
    %v459 = vrot.slane %v394, %v458
    %vm460 = vcmask 261312
    %v461 = vsel %vm460, %v459, %v454
    %v462 = vadd.s32 %v436, 4294967264
    %v463 = vlaneseq
    %v464 = vshrl.u32 %v463, 7
    %v465 = vsub.s32 %v462, %v464
    %v466 = vrot.slane %v396, %v465
    %vm467 = vcmask 326912
    %v468 = vsel %vm467, %v466, %v461
    %v469 = vadd.s32 %v436, 4294967256
    %v470 = vlaneseq
    %v471 = vshrl.u32 %v470, 7
    %v472 = vsub.s32 %v469, %v471
    %v473 = vrot.slane %v398, %v472
    %vm474 = vcmask 392512
    %v475 = vsel %vm474, %v473, %v468
    %v476 = vadd.s32 %v436, 4294967248
    %v477 = vlaneseq
    %v478 = vshrl.u32 %v477, 7
    %v479 = vsub.s32 %v476, %v478
    %v480 = vrot.slane %v400, %v479
    %vm481 = vcmask 458112
    %v482 = vsel %vm481, %v480, %v475
    %v483 = vadd.s32 %v436, 4294967240
    %v484 = vlaneseq
    %v485 = vshrl.u32 %v484, 7
    %v486 = vsub.s32 %v483, %v485
    %v487 = vrot.slane %v402, %v486
    %vm488 = vcmask 523712
    %v489 = vsel %vm488, %v487, %v482
    %v490 = vadd.s32 %v436, 4294967232
    %v491 = vlaneseq
    %v492 = vshrl.u32 %v491, 7
    %v493 = vsub.s32 %v490, %v492
    %v494 = vrot.slane %v404, %v493
    %vm495 = vcmask 589312
    %v496 = vsel %vm495, %v494, %v489
    %v497 = vadd.s32 %v436, 4294967224
    %v498 = vlaneseq
    %v499 = vshrl.u32 %v498, 7
    %v500 = vsub.s32 %v497, %v499
    %v501 = vrot.slane %v406, %v500
    %vm502 = vcmask 654912
    %v503 = vsel %vm502, %v501, %v496
    %v504 = vadd.s32 %v436, 4294967216
    %v505 = vlaneseq
    %v506 = vshrl.u32 %v505, 7
    %v507 = vsub.s32 %v504, %v506
    %v508 = vrot.slane %v408, %v507
    %vm509 = vcmask 720512
    %v510 = vsel %vm509, %v508, %v503
    %v511 = vadd.s32 %v436, 4294967208
    %v512 = vlaneseq
    %v513 = vshrl.u32 %v512, 7
    %v514 = vsub.s32 %v511, %v513
    %v515 = vrot.slane %v410, %v514
    %vm516 = vcmask 786112
    %v517 = vsel %vm516, %v515, %v510
    %v518 = vadd.s32 %v436, 4294967200
    %v519 = vlaneseq
    %v520 = vshrl.u32 %v519, 7
    %v521 = vsub.s32 %v518, %v520
    %v522 = vrot.slane %v412, %v521
    %vm523 = vcmask 851712
    %v524 = vsel %vm523, %v522, %v517
    %v525 = vadd.s32 %v436, 4294967192
    %v526 = vlaneseq
    %v527 = vshrl.u32 %v526, 7
    %v528 = vsub.s32 %v525, %v527
    %v529 = vrot.slane %v414, %v528
    %vm530 = vcmask 917312
    %v531 = vsel %vm530, %v529, %v524
    %v532 = vadd.s32 %v436, 4294967184
    %v533 = vlaneseq
    %v534 = vshrl.u32 %v533, 7
    %v535 = vsub.s32 %v532, %v534
    %v536 = vrot.slane %v416, %v535
    %vm537 = vcmask 982912
    %v538 = vsel %vm537, %v536, %v531
    %v539 = vadd.s32 %v436, 4294967176
    %v540 = vlaneseq
    %v541 = vshrl.u32 %v540, 7
    %v542 = vsub.s32 %v539, %v541
    %v543 = vrot.slane %v418, %v542
    %vm544 = vcmask 1048512
    %v545 = vsel %vm544, %v543, %v538
    %547 = vst [vmem:[#allocation8] sm:$0x1] %v545
    // Predicated region
    $region30: #{tpu_custom_call.1} parent=1 // pred_check
      _
    $region31: #{tpu_custom_call.1} parent=1 // pred_check_branch
      %549 = sbr.rel (0) target = $region33
    $region32: #{tpu_custom_call.1} parent=1 // pred_region
      %s551 = ssub.s32 16, 16
      %552 = vsyncadd [#allocation5], %s551
      %s554 = sshll.u32 [#allocation8], 4
      %s555 = int_to_ptr.vmem [resolvable:$true] %s554
      %557 = dma.vmem_to_hbm [thread:$0]  %s555, 16, %s5, [#allocation5]
    $region33: #{tpu_custom_call.1} parent=1 // pred_fallthru
      _
    // Predicated region
    $region34: #{tpu_custom_call.1} parent=1 // pred_check
      _
    $region35: #{tpu_custom_call.1} parent=1 // pred_check_branch
      %559 = sbr.rel (0) target = $region37
    $region36: #{tpu_custom_call.1} parent=1 // pred_region
      %560 = dma.done [#allocation5], 16
    $region37: #{tpu_custom_call.1} parent=1 // pred_fallthru
      _
    %561 = vsyncpa [#allocation4], 1
    %562 = vsyncpa [#allocation7], 1
    %563 = vsyncpa [#allocation5], 1

// kernel: tpu_custom_call.1
$region0: #{tpu_custom_call.1}
  #allocation0 [shape = 'u32[]', space=smem, size = 0x4, offset = 0x4, fixed_abs, tag = 'smem constant byte address 0x4 - core index']
  #allocation1 [shape = 'u32[144,128]{1,0:T(1,128)}', space=vmem, size = 0x12000, scoped, tag = 'internal scratch']
  #allocation2 [shape = 'f32[1]{0:T(128)S(6)}', space=smem, size = 0x200, scoped, tag = 'scoped memory for tpu_custom_call.1']
  %s0 = inlined_call_operand.hbm [shape: f32[128,128], index: 0, kind: input, shape index: {}]
  %s1 = inlined_call_operand.hbm [shape: f32[128,128], index: 1, kind: input, shape index: {}]
  %s2 = inlined_call_operand.vmem [shape: f32[1,128], index: 2, kind: input, shape index: {}]
  %s3 = inlined_call_operand.vmem [shape: f32[1,128], index: 3, kind: input, shape index: {}]
  %s4 = inlined_call_operand.<no memory space> [shape: f32[1], index: 4, kind: input, shape index: {}]
  %s5 = inlined_call_operand.hbm [shape: f32[1,1,128], index: 5, kind: output, shape index: {}]
  %s6 = sld [smem:[#allocation0]]
  $region38: #{tpu_custom_call.1} parent=0
    _
  %s8 = ssub.s32 1, %s6
  %s9 = scalar_select 0, %s8, %s6
  %10 = sst [smem:[#allocation2]] %s4
  $region1: #{tpu_custom_call.1} parent=0
    #allocation3 [shape = 'u8[65536]{0}', space=vmem, size = 0x10000, scoped, tag = 'input window, operand 0, single buffered']
    #allocation4 [shape = 's32[1]{0}', space=sflag, size = 0x4, scoped, tag = 'scoped memory for tpu_custom_call.1']
    #allocation5 [shape = 's32[1]{0}', space=sflag, size = 0x4, scoped, tag = 'scoped memory for tpu_custom_call.1']
    #allocation6 [shape = 'u8[65536]{0}', space=vmem, size = 0x10000, scoped, tag = 'input window, operand 1, single buffered']
    #allocation7 [shape = 's32[1]{0}', space=sflag, size = 0x4, scoped, tag = 'scoped memory for tpu_custom_call.1']
    #allocation8 [shape = 'u8[512]{0}', space=vmem, size = 0x400, scoped, tag = 'output window, operand 0, single buffered']
    %11 = vsyncpa [#allocation4], 0
    %12 = vsyncpa [#allocation7], 0
    %13 = vsyncpa [#allocation5], 0
    // Predicated region
    $region2: #{tpu_custom_call.1} parent=1 // pred_check
      _
    $region3: #{tpu_custom_call.1} parent=1 // pred_check_branch
      %15 = sbr.rel (0) target = $region5
    $region4: #{tpu_custom_call.1} parent=1 // pred_region
      %s17 = ssub.s32 2048, 2048
      %18 = vsyncadd [#allocation4], %s17
      %s19 = sshll.u32 [#allocation3], 4
      %s20 = int_to_ptr.vmem [resolvable:$true] %s19
      %25 = dma.hbm_to_vmem [thread:$0]  %s0, 2048, %s20, [#allocation4], 128, 128, 8
    $region5: #{tpu_custom_call.1} parent=1 // pred_fallthru
      _
    // Predicated region
    $region6: #{tpu_custom_call.1} parent=1 // pred_check
      _
    $region7: #{tpu_custom_call.1} parent=1 // pred_check_branch
      %27 = sbr.rel (0) target = $region9
    $region8: #{tpu_custom_call.1} parent=1 // pred_region
      %s29 = ssub.s32 2048, 2048
      %30 = vsyncadd [#allocation7], %s29
      %s31 = sshll.u32 [#allocation6], 4
      %s32 = int_to_ptr.vmem [resolvable:$true] %s31
      %37 = dma.hbm_to_vmem [thread:$0]  %s1, 2048, %s32, [#allocation7], 128, 128, 8
    $region9: #{tpu_custom_call.1} parent=1 // pred_fallthru
      _
    // Predicated region
    $region10: #{tpu_custom_call.1} parent=1 // pred_check
      _
    $region11: #{tpu_custom_call.1} parent=1 // pred_check_branch
      %39 = sbr.rel (0) target = $region13
    $region12: #{tpu_custom_call.1} parent=1 // pred_region
      _
    $region13: #{tpu_custom_call.1} parent=1 // pred_fallthru
      _
    // Predicated region
    $region14: #{tpu_custom_call.1} parent=1 // pred_check
      _
    $region15: #{tpu_custom_call.1} parent=1 // pred_check_branch
      %41 = sbr.rel (0) target = $region17
    $region16: #{tpu_custom_call.1} parent=1 // pred_region
      _
    $region17: #{tpu_custom_call.1} parent=1 // pred_fallthru
      _
    // Predicated region
    $region18: #{tpu_custom_call.1} parent=1 // pred_check
      _
    $region19: #{tpu_custom_call.1} parent=1 // pred_check_branch
      %43 = sbr.rel (0) target = $region21
    $region20: #{tpu_custom_call.1} parent=1 // pred_region
      _
    $region21: #{tpu_custom_call.1} parent=1 // pred_fallthru
      _
    // Predicated region
    $region22: #{tpu_custom_call.1} parent=1 // pred_check
      _
    $region23: #{tpu_custom_call.1} parent=1 // pred_check_branch
      %45 = sbr.rel (0) target = $region25
    $region24: #{tpu_custom_call.1} parent=1 // pred_region
      %46 = dma.done [#allocation4], 2048
    $region25: #{tpu_custom_call.1} parent=1 // pred_fallthru
      _
    // Predicated region
    $region26: #{tpu_custom_call.1} parent=1 // pred_check
      _
    $region27: #{tpu_custom_call.1} parent=1 // pred_check_branch
      %48 = sbr.rel (0) target = $region29
    $region28: #{tpu_custom_call.1} parent=1 // pred_region
      %49 = dma.done [#allocation7], 2048
    $region29: #{tpu_custom_call.1} parent=1 // pred_fallthru
      _
    %v50 = vld [vmem:[#allocation3] sm:$0xff]
    %v51 = vld [vmem:[#allocation3 + $0x8] sm:$0xff]
    %v52 = vld [vmem:[#allocation3 + $0x10] sm:$0xff]
    %v53 = vld [vmem:[#allocation3 + $0x18] sm:$0xff]
    %v54 = vld [vmem:[#allocation3 + $0x20] sm:$0xff]
    %v55 = vld [vmem:[#allocation3 + $0x28] sm:$0xff]
    %v56 = vld [vmem:[#allocation3 + $0x30] sm:$0xff]
    %v57 = vld [vmem:[#allocation3 + $0x38] sm:$0xff]
    %v58 = vld [vmem:[#allocation3 + $0x40] sm:$0xff]
    %v59 = vld [vmem:[#allocation3 + $0x48] sm:$0xff]
    %v60 = vld [vmem:[#allocation3 + $0x50] sm:$0xff]
    %v61 = vld [vmem:[#allocation3 + $0x58] sm:$0xff]
    %v62 = vld [vmem:[#allocation3 + $0x60] sm:$0xff]
    %v63 = vld [vmem:[#allocation3 + $0x68] sm:$0xff]
    %v64 = vld [vmem:[#allocation3 + $0x70] sm:$0xff]
    %v65 = vld [vmem:[#allocation3 + $0x78] sm:$0xff]
    %v66 = vld [vmem:[#allocation6] sm:$0xff]
    %v67 = vld [vmem:[#allocation6 + $0x8] sm:$0xff]
    %v68 = vld [vmem:[#allocation6 + $0x10] sm:$0xff]
    %v69 = vld [vmem:[#allocation6 + $0x18] sm:$0xff]
    %v70 = vld [vmem:[#allocation6 + $0x20] sm:$0xff]
    %v71 = vld [vmem:[#allocation6 + $0x28] sm:$0xff]
    %v72 = vld [vmem:[#allocation6 + $0x30] sm:$0xff]
    %v73 = vld [vmem:[#allocation6 + $0x38] sm:$0xff]
    %v74 = vld [vmem:[#allocation6 + $0x40] sm:$0xff]
    %v75 = vld [vmem:[#allocation6 + $0x48] sm:$0xff]
    %v76 = vld [vmem:[#allocation6 + $0x50] sm:$0xff]
    %v77 = vld [vmem:[#allocation6 + $0x58] sm:$0xff]
    %v78 = vld [vmem:[#allocation6 + $0x60] sm:$0xff]
    %v79 = vld [vmem:[#allocation6 + $0x68] sm:$0xff]
    %v80 = vld [vmem:[#allocation6 + $0x70] sm:$0xff]
    %v81 = vld [vmem:[#allocation6 + $0x78] sm:$0xff]
    %v82 = vld [vmem:[%s2] sm:$0x1]
    %v84 = vlaneseq
    %v85 = vshrl.u32 %v84, 7
    %v86 = vsub.s32 0, %v85
    %v87 = vrot.slane %v82, %v86
    %89 = vmatprep.subr.mxu0 0.0
    %90 = vmatpush1.msra.mxu0 %v66
    %91 = vmatprep.subr.mxu0 0.0
    %92 = vmatpush1.msra.mxu0 %v67
    %93 = vmatprep.subr.mxu0 0.0
    %94 = vmatpush1.msra.mxu0 %v68
    %95 = vmatprep.subr.mxu0 0.0
    %96 = vmatpush1.msra.mxu0 %v69
    %97 = vmatprep.subr.mxu0 0.0
    %98 = vmatpush1.msra.mxu0 %v70
    %99 = vmatprep.subr.mxu0 0.0
    %100 = vmatpush1.msra.mxu0 %v71
    %101 = vmatprep.subr.mxu0 0.0
    %102 = vmatpush1.msra.mxu0 %v72
    %103 = vmatprep.subr.mxu0 0.0
    %104 = vmatpush1.msra.mxu0 %v73
    %105 = vmatprep.subr.mxu0 0.0
    %106 = vmatpush1.msra.mxu0 %v74
    %107 = vmatprep.subr.mxu0 0.0
    %108 = vmatpush1.msra.mxu0 %v75
    %109 = vmatprep.subr.mxu0 0.0
    %110 = vmatpush1.msra.mxu0 %v76
    %111 = vmatprep.subr.mxu0 0.0
    %112 = vmatpush1.msra.mxu0 %v77
    %113 = vmatprep.subr.mxu0 0.0
    %114 = vmatpush1.msra.mxu0 %v78
    %115 = vmatprep.subr.mxu0 0.0
    %116 = vmatpush1.msra.mxu0 %v79
    %117 = vmatprep.subr.mxu0 0.0
    %118 = vmatpush1.msra.mxu0 %v80
    %119 = vmatprep.subr.mxu0 0.0
    %120 = vmatpush1.msra.mxu0 %v81
    %121 = vmatprep.subr.mxu0 0.0
    %122 = vmatpush1.msra.mxu0 0.0
    %123 = vmatprep.subr.mxu0 0.0
    %124 = vmatpush1.msra.mxu0 0.0
    %125 = vmatprep.subr.mxu0 0.0
    %126 = vmatpush1.msra.mxu0 0.0
    %127 = vmatprep.subr.mxu0 0.0
    %128 = vmatpush1.msra.mxu0 0.0
    %129 = vmatprep.subr.mxu0 0.0
    %130 = vmatpush1.msra.mxu0 0.0
    %131 = vmatprep.subr.mxu0 0.0
    %132 = vmatpush1.msra.mxu0 0.0
    %133 = vmatprep.subr.mxu0 0.0
    %134 = vmatpush1.msra.mxu0 0.0
    %135 = vmatprep.subr.mxu0 0.0
    %136 = vmatpush1.msra.mxu0 0.0
    %137 = vmatprep.subr.mxu0 0.0
    %138 = vmatpush1.msra.mxu0 0.0
    %139 = vmatprep.subr.mxu0 0.0
    %140 = vmatpush1.msra.mxu0 0.0
    %141 = vmatprep.subr.mxu0 0.0
    %142 = vmatpush1.msra.mxu0 0.0
    %143 = vmatprep.subr.mxu0 0.0
    %144 = vmatpush1.msra.mxu0 0.0
    %145 = vmatprep.subr.mxu0 0.0
    %146 = vmatpush1.msra.mxu0 0.0
    %147 = vmatprep.subr.mxu0 0.0
    %148 = vmatpush1.msra.mxu0 0.0
    %149 = vmatprep.subr.mxu0 0.0
    %150 = vmatpush1.msra.mxu0 0.0
    %151 = vmatprep.subr.mxu0 0.0
    %152 = vmatpush1.msra.mxu0 0.0
    %153 = vmatprep.mubr.f32.mxu0 0.0
    %154 = vmatmul.mubr.f32.gmra.mrb[0].mxu0 %v50
    %v155 = vpop.f32.mrb[0].mxu0
    %v156 = vadd.f32 %v87, %v155
    %v157 = vpop.f32.mrb[0].mxu0
    %158 = vmatprep.mubr.f32.mxu0 0.0
    %159 = vmatmul.mubr.f32.gmra.mrb[0].mxu0 %v51
    %v160 = vpop.f32.mrb[0].mxu0
    %v161 = vadd.f32 %v87, %v160
    %v162 = vpop.f32.mrb[0].mxu0
    %163 = vmatprep.mubr.f32.mxu0 0.0
    %164 = vmatmul.mubr.f32.gmra.mrb[0].mxu0 %v52
    %v165 = vpop.f32.mrb[0].mxu0
    %v166 = vadd.f32 %v87, %v165
    %v167 = vpop.f32.mrb[0].mxu0
    %168 = vmatprep.mubr.f32.mxu0 0.0
    %169 = vmatmul.mubr.f32.gmra.mrb[0].mxu0 %v53
    %v170 = vpop.f32.mrb[0].mxu0
    %v171 = vadd.f32 %v87, %v170
    %v172 = vpop.f32.mrb[0].mxu0
    %173 = vmatprep.mubr.f32.mxu0 0.0
    %174 = vmatmul.mubr.f32.gmra.mrb[0].mxu0 %v54
    %v175 = vpop.f32.mrb[0].mxu0
    %v176 = vadd.f32 %v87, %v175
    %v177 = vpop.f32.mrb[0].mxu0
    %178 = vmatprep.mubr.f32.mxu0 0.0
    %179 = vmatmul.mubr.f32.gmra.mrb[0].mxu0 %v55
    %v180 = vpop.f32.mrb[0].mxu0
    %v181 = vadd.f32 %v87, %v180
    %v182 = vpop.f32.mrb[0].mxu0
    %183 = vmatprep.mubr.f32.mxu0 0.0
    %184 = vmatmul.mubr.f32.gmra.mrb[0].mxu0 %v56
    %v185 = vpop.f32.mrb[0].mxu0
    %v186 = vadd.f32 %v87, %v185
    %v187 = vpop.f32.mrb[0].mxu0
    %188 = vmatprep.mubr.f32.mxu0 0.0
    %189 = vmatmul.mubr.f32.gmra.mrb[0].mxu0 %v57
    %v190 = vpop.f32.mrb[0].mxu0
    %v191 = vadd.f32 %v87, %v190
    %v192 = vpop.f32.mrb[0].mxu0
    %193 = vmatprep.mubr.f32.mxu0 0.0
    %194 = vmatmul.mubr.f32.gmra.mrb[0].mxu0 %v58
    %v195 = vpop.f32.mrb[0].mxu0
    %v196 = vadd.f32 %v87, %v195
    %v197 = vpop.f32.mrb[0].mxu0
    %198 = vmatprep.mubr.f32.mxu0 0.0
    %199 = vmatmul.mubr.f32.gmra.mrb[0].mxu0 %v59
    %v200 = vpop.f32.mrb[0].mxu0
    %v201 = vadd.f32 %v87, %v200
    %v202 = vpop.f32.mrb[0].mxu0
    %203 = vmatprep.mubr.f32.mxu0 0.0
    %204 = vmatmul.mubr.f32.gmra.mrb[0].mxu0 %v60
    %v205 = vpop.f32.mrb[0].mxu0
    %v206 = vadd.f32 %v87, %v205
    %v207 = vpop.f32.mrb[0].mxu0
    %208 = vmatprep.mubr.f32.mxu0 0.0
    %209 = vmatmul.mubr.f32.gmra.mrb[0].mxu0 %v61
    %v210 = vpop.f32.mrb[0].mxu0
    %v211 = vadd.f32 %v87, %v210
    %v212 = vpop.f32.mrb[0].mxu0
    %213 = vmatprep.mubr.f32.mxu0 0.0
    %214 = vmatmul.mubr.f32.gmra.mrb[0].mxu0 %v62
    %v215 = vpop.f32.mrb[0].mxu0
    %v216 = vadd.f32 %v87, %v215
    %v217 = vpop.f32.mrb[0].mxu0
    %218 = vmatprep.mubr.f32.mxu0 0.0
    %219 = vmatmul.mubr.f32.gmra.mrb[0].mxu0 %v63
    %v220 = vpop.f32.mrb[0].mxu0
    %v221 = vadd.f32 %v87, %v220
    %v222 = vpop.f32.mrb[0].mxu0
    %223 = vmatprep.mubr.f32.mxu0 0.0
    %224 = vmatmul.mubr.f32.gmra.mrb[0].mxu0 %v64
    %v225 = vpop.f32.mrb[0].mxu0
    %v226 = vadd.f32 %v87, %v225
    %v227 = vpop.f32.mrb[0].mxu0
    %228 = vmatprep.mubr.f32.mxu0 0.0
    %229 = vmatmul.mubr.f32.gmra.mrb[0].mxu0 %v65
    %v230 = vpop.f32.mrb[0].mxu0
    %v231 = vadd.f32 %v87, %v230
    %v232 = vpop.f32.mrb[0].mxu0
    %233 = vdwg.mxu0
    %v234 = vtanh.pop %v156
    %v235 = vtanh.pop %v161
    %v236 = vtanh.pop %v166
    %v237 = vtanh.pop %v171
    %v238 = vtanh.pop %v176
    %v239 = vtanh.pop %v181
    %v240 = vtanh.pop %v186
    %v241 = vtanh.pop %v191
    %v242 = vtanh.pop %v196
    %v243 = vtanh.pop %v201
    %v244 = vtanh.pop %v206
    %v245 = vtanh.pop %v211
    %v246 = vtanh.pop %v216
    %v247 = vtanh.pop %v221
    %v248 = vtanh.pop %v226
    %v249 = vtanh.pop %v231
    %v250 = vld [vmem:[%s3] sm:$0x1]
    %v252 = vlaneseq
    %v253 = vshrl.u32 %v252, 7
    %v254 = vsub.s32 0, %v253
    %v255 = vrot.slane %v250, %v254
    %v257 = vmul.f32 %v234, %v255
    %v258 = vmul.f32 %v235, %v255
    %v259 = vmul.f32 %v236, %v255
    %v260 = vmul.f32 %v237, %v255
    %v261 = vmul.f32 %v238, %v255
    %v262 = vmul.f32 %v239, %v255
    %v263 = vmul.f32 %v240, %v255
    %v264 = vmul.f32 %v241, %v255
    %v265 = vmul.f32 %v242, %v255
    %v266 = vmul.f32 %v243, %v255
    %v267 = vmul.f32 %v244, %v255
    %v268 = vmul.f32 %v245, %v255
    %v269 = vmul.f32 %v246, %v255
    %v270 = vmul.f32 %v247, %v255
    %v271 = vmul.f32 %v248, %v255
    %v272 = vmul.f32 %v249, %v255
    %273 = vadd.xlane.f32.xlu0 %v257
    %v274 = vpop.xlane.xlu0 %273
    %275 = vadd.xlane.f32.xlu0 %v258
    %v276 = vpop.xlane.xlu0 %275
    %277 = vadd.xlane.f32.xlu0 %v259
    %v278 = vpop.xlane.xlu0 %277
    %279 = vadd.xlane.f32.xlu0 %v260
    %v280 = vpop.xlane.xlu0 %279
    %281 = vadd.xlane.f32.xlu0 %v261
    %v282 = vpop.xlane.xlu0 %281
    %283 = vadd.xlane.f32.xlu0 %v262
    %v284 = vpop.xlane.xlu0 %283
    %285 = vadd.xlane.f32.xlu0 %v263
    %v286 = vpop.xlane.xlu0 %285
    %287 = vadd.xlane.f32.xlu0 %v264
    %v288 = vpop.xlane.xlu0 %287
    %289 = vadd.xlane.f32.xlu0 %v265
    %v290 = vpop.xlane.xlu0 %289
    %291 = vadd.xlane.f32.xlu0 %v266
    %v292 = vpop.xlane.xlu0 %291
    %293 = vadd.xlane.f32.xlu0 %v267
    %v294 = vpop.xlane.xlu0 %293
    %295 = vadd.xlane.f32.xlu0 %v268
    %v296 = vpop.xlane.xlu0 %295
    %297 = vadd.xlane.f32.xlu0 %v269
    %v298 = vpop.xlane.xlu0 %297
    %299 = vadd.xlane.f32.xlu0 %v270
    %v300 = vpop.xlane.xlu0 %299
    %301 = vadd.xlane.f32.xlu0 %v271
    %v302 = vpop.xlane.xlu0 %301
    %303 = vadd.xlane.f32.xlu0 %v272
    %v304 = vpop.xlane.xlu0 %303
    %s305 = sld [smem:[#allocation2]]
    %v306 = vstv %s305
    %v307 = vadd.f32 %v274, %v306
    %v308 = vadd.f32 %v276, %v306
    %v309 = vadd.f32 %v278, %v306
    %v310 = vadd.f32 %v280, %v306
    %v311 = vadd.f32 %v282, %v306
    %v312 = vadd.f32 %v284, %v306
    %v313 = vadd.f32 %v286, %v306
    %v314 = vadd.f32 %v288, %v306
    %v315 = vadd.f32 %v290, %v306
    %v316 = vadd.f32 %v292, %v306
    %v317 = vadd.f32 %v294, %v306
    %v318 = vadd.f32 %v296, %v306
    %v319 = vadd.f32 %v298, %v306
    %v320 = vadd.f32 %v300, %v306
    %v321 = vadd.f32 %v302, %v306
    %v322 = vadd.f32 %v304, %v306
    %v323 = vxor.u32 %v307, 2147483648
    %v324 = vxor.u32 %v308, 2147483648
    %v325 = vxor.u32 %v309, 2147483648
    %v326 = vxor.u32 %v310, 2147483648
    %v327 = vxor.u32 %v311, 2147483648
    %v328 = vxor.u32 %v312, 2147483648
    %v329 = vxor.u32 %v313, 2147483648
    %v330 = vxor.u32 %v314, 2147483648
    %v331 = vxor.u32 %v315, 2147483648
    %v332 = vxor.u32 %v316, 2147483648
    %v333 = vxor.u32 %v317, 2147483648
    %v334 = vxor.u32 %v318, 2147483648
    %v335 = vxor.u32 %v319, 2147483648
    %v336 = vxor.u32 %v320, 2147483648
    %v337 = vxor.u32 %v321, 2147483648
    %v338 = vxor.u32 %v322, 2147483648
    %v339 = vmul.f32 %v323, 1.442695
    %v340 = vpow.pop %v339
    %v341 = vmul.f32 %v324, 1.442695
    %v342 = vpow.pop %v341
    %v343 = vmul.f32 %v325, 1.442695
    %v344 = vpow.pop %v343
    %v345 = vmul.f32 %v326, 1.442695
    %v346 = vpow.pop %v345
    %v347 = vmul.f32 %v327, 1.442695
    %v348 = vpow.pop %v347
    %v349 = vmul.f32 %v328, 1.442695
    %v350 = vpow.pop %v349
    %v351 = vmul.f32 %v329, 1.442695
    %v352 = vpow.pop %v351
    %v353 = vmul.f32 %v330, 1.442695
    %v354 = vpow.pop %v353
    %v355 = vmul.f32 %v331, 1.442695
    %v356 = vpow.pop %v355
    %v357 = vmul.f32 %v332, 1.442695
    %v358 = vpow.pop %v357
    %v359 = vmul.f32 %v333, 1.442695
    %v360 = vpow.pop %v359
    %v361 = vmul.f32 %v334, 1.442695
    %v362 = vpow.pop %v361
    %v363 = vmul.f32 %v335, 1.442695
    %v364 = vpow.pop %v363
    %v365 = vmul.f32 %v336, 1.442695
    %v366 = vpow.pop %v365
    %v367 = vmul.f32 %v337, 1.442695
    %v368 = vpow.pop %v367
    %v369 = vmul.f32 %v338, 1.442695
    %v370 = vpow.pop %v369
    %v371 = vadd.f32 %v340, 1.0
    %v372 = vadd.f32 %v342, 1.0
    %v373 = vadd.f32 %v344, 1.0
    %v374 = vadd.f32 %v346, 1.0
    %v375 = vadd.f32 %v348, 1.0
    %v376 = vadd.f32 %v350, 1.0
    %v377 = vadd.f32 %v352, 1.0
    %v378 = vadd.f32 %v354, 1.0
    %v379 = vadd.f32 %v356, 1.0
    %v380 = vadd.f32 %v358, 1.0
    %v381 = vadd.f32 %v360, 1.0
    %v382 = vadd.f32 %v362, 1.0
    %v383 = vadd.f32 %v364, 1.0
    %v384 = vadd.f32 %v366, 1.0
    %v385 = vadd.f32 %v368, 1.0
    %v386 = vadd.f32 %v370, 1.0
    %v387 = vrcp.pop %v371
    %v388 = vmul.f32 1.0, %v387
    %v389 = vrcp.pop %v372
    %v390 = vmul.f32 1.0, %v389
    %v391 = vrcp.pop %v373
    %v392 = vmul.f32 1.0, %v391
    %v393 = vrcp.pop %v374
    %v394 = vmul.f32 1.0, %v393
    %v395 = vrcp.pop %v375
    %v396 = vmul.f32 1.0, %v395
    %v397 = vrcp.pop %v376
    %v398 = vmul.f32 1.0, %v397
    %v399 = vrcp.pop %v377
    %v400 = vmul.f32 1.0, %v399
    %v401 = vrcp.pop %v378
    %v402 = vmul.f32 1.0, %v401
    %v403 = vrcp.pop %v379
    %v404 = vmul.f32 1.0, %v403
    %v405 = vrcp.pop %v380
    %v406 = vmul.f32 1.0, %v405
    %v407 = vrcp.pop %v381
    %v408 = vmul.f32 1.0, %v407
    %v409 = vrcp.pop %v382
    %v410 = vmul.f32 1.0, %v409
    %v411 = vrcp.pop %v383
    %v412 = vmul.f32 1.0, %v411
    %v413 = vrcp.pop %v384
    %v414 = vmul.f32 1.0, %v413
    %v415 = vrcp.pop %v385
    %v416 = vmul.f32 1.0, %v415
    %v417 = vrcp.pop %v386
    %v418 = vmul.f32 1.0, %v417
    %v435 = vlaneseq
    %v436 = vand.u32 %v435, 127
    %v437 = vlaneseq
    %v438 = vshrl.u32 %v437, 7
    %v439 = vsub.s32 %v436, %v438
    %v440 = vrot.slane %v388, %v439
    %v441 = vadd.s32 %v436, 4294967288
    %v442 = vlaneseq
    %v443 = vshrl.u32 %v442, 7
    %v444 = vsub.s32 %v441, %v443
    %v445 = vrot.slane %v390, %v444
    %vm446 = vcmask 130112
    %v447 = vsel %vm446, %v445, %v440
    %v448 = vadd.s32 %v436, 4294967280
    %v449 = vlaneseq
    %v450 = vshrl.u32 %v449, 7
    %v451 = vsub.s32 %v448, %v450
    %v452 = vrot.slane %v392, %v451
    %vm453 = vcmask 195712
    %v454 = vsel %vm453, %v452, %v447
    %v455 = vadd.s32 %v436, 4294967272
    %v456 = vlaneseq
    %v457 = vshrl.u32 %v456, 7
    %v458 = vsub.s32 %v455, %v457
    %v459 = vrot.slane %v394, %v458
    %vm460 = vcmask 261312
    %v461 = vsel %vm460, %v459, %v454
    %v462 = vadd.s32 %v436, 4294967264
    %v463 = vlaneseq
    %v464 = vshrl.u32 %v463, 7
    %v465 = vsub.s32 %v462, %v464
    %v466 = vrot.slane %v396, %v465
    %vm467 = vcmask 326912
    %v468 = vsel %vm467, %v466, %v461
    %v469 = vadd.s32 %v436, 4294967256
    %v470 = vlaneseq
    %v471 = vshrl.u32 %v470, 7
    %v472 = vsub.s32 %v469, %v471
    %v473 = vrot.slane %v398, %v472
    %vm474 = vcmask 392512
    %v475 = vsel %vm474, %v473, %v468
    %v476 = vadd.s32 %v436, 4294967248
    %v477 = vlaneseq
    %v478 = vshrl.u32 %v477, 7
    %v479 = vsub.s32 %v476, %v478
    %v480 = vrot.slane %v400, %v479
    %vm481 = vcmask 458112
    %v482 = vsel %vm481, %v480, %v475
    %v483 = vadd.s32 %v436, 4294967240
    %v484 = vlaneseq
    %v485 = vshrl.u32 %v484, 7
    %v486 = vsub.s32 %v483, %v485
    %v487 = vrot.slane %v402, %v486
    %vm488 = vcmask 523712
    %v489 = vsel %vm488, %v487, %v482
    %v490 = vadd.s32 %v436, 4294967232
    %v491 = vlaneseq
    %v492 = vshrl.u32 %v491, 7
    %v493 = vsub.s32 %v490, %v492
    %v494 = vrot.slane %v404, %v493
    %vm495 = vcmask 589312
    %v496 = vsel %vm495, %v494, %v489
    %v497 = vadd.s32 %v436, 4294967224
    %v498 = vlaneseq
    %v499 = vshrl.u32 %v498, 7
    %v500 = vsub.s32 %v497, %v499
    %v501 = vrot.slane %v406, %v500
    %vm502 = vcmask 654912
    %v503 = vsel %vm502, %v501, %v496
    %v504 = vadd.s32 %v436, 4294967216
    %v505 = vlaneseq
    %v506 = vshrl.u32 %v505, 7
    %v507 = vsub.s32 %v504, %v506
    %v508 = vrot.slane %v408, %v507
    %vm509 = vcmask 720512
    %v510 = vsel %vm509, %v508, %v503
    %v511 = vadd.s32 %v436, 4294967208
    %v512 = vlaneseq
    %v513 = vshrl.u32 %v512, 7
    %v514 = vsub.s32 %v511, %v513
    %v515 = vrot.slane %v410, %v514
    %vm516 = vcmask 786112
    %v517 = vsel %vm516, %v515, %v510
    %v518 = vadd.s32 %v436, 4294967200
    %v519 = vlaneseq
    %v520 = vshrl.u32 %v519, 7
    %v521 = vsub.s32 %v518, %v520
    %v522 = vrot.slane %v412, %v521
    %vm523 = vcmask 851712
    %v524 = vsel %vm523, %v522, %v517
    %v525 = vadd.s32 %v436, 4294967192
    %v526 = vlaneseq
    %v527 = vshrl.u32 %v526, 7
    %v528 = vsub.s32 %v525, %v527
    %v529 = vrot.slane %v414, %v528
    %vm530 = vcmask 917312
    %v531 = vsel %vm530, %v529, %v524
    %v532 = vadd.s32 %v436, 4294967184
    %v533 = vlaneseq
    %v534 = vshrl.u32 %v533, 7
    %v535 = vsub.s32 %v532, %v534
    %v536 = vrot.slane %v416, %v535
    %vm537 = vcmask 982912
    %v538 = vsel %vm537, %v536, %v531
    %v539 = vadd.s32 %v436, 4294967176
    %v540 = vlaneseq
    %v541 = vshrl.u32 %v540, 7
    %v542 = vsub.s32 %v539, %v541
    %v543 = vrot.slane %v418, %v542
    %vm544 = vcmask 1048512
    %v545 = vsel %vm544, %v543, %v538
    %547 = vst [vmem:[#allocation8] sm:$0x1] %v545
    // Predicated region
    $region30: #{tpu_custom_call.1} parent=1 // pred_check
      _
    $region31: #{tpu_custom_call.1} parent=1 // pred_check_branch
      %549 = sbr.rel (0) target = $region33
    $region32: #{tpu_custom_call.1} parent=1 // pred_region
      %s551 = ssub.s32 16, 16
      %552 = vsyncadd [#allocation5], %s551
      %s554 = sshll.u32 [#allocation8], 4
      %s555 = int_to_ptr.vmem [resolvable:$true] %s554
      %557 = dma.vmem_to_hbm [thread:$0]  %s555, 16, %s5, [#allocation5]
    $region33: #{tpu_custom_call.1} parent=1 // pred_fallthru
      _
    // Predicated region
    $region34: #{tpu_custom_call.1} parent=1 // pred_check
      _
    $region35: #{tpu_custom_call.1} parent=1 // pred_check_branch
      %559 = sbr.rel (0) target = $region37
    $region36: #{tpu_custom_call.1} parent=1 // pred_region
      %560 = dma.done [#allocation5], 16
    $region37: #{tpu_custom_call.1} parent=1 // pred_fallthru
      _
    %561 = vsyncpa [#allocation4], 1
    %562 = vsyncpa [#allocation7], 1
    %563 = vsyncpa [#allocation5], 1

</llo_original>
